<compile_context>
chip_gen: v7x
topology: tpu7x:2x2x1
jax: 0.10.0
libtpu: 0.0.40
codegen_flags: <defaults>
</compile_context>

<pallas_src>
import math

import jax
import jax.numpy as jnp
from jax.experimental import pallas as pl
from jax.experimental.pallas import tpu as pltpu

_LANE = 128


# ----------------------------------------------------------------------------
# Helpers: rounding, VMEM budget, tile selection
# ----------------------------------------------------------------------------
def _round_up(x, m):
    return ((x + m - 1) // m) * m


def _sublane(dtype):
    # bf16/f16 pack 2 rows per sublane -> use multiples of 16 for the M tile.
    return 16 if jnp.dtype(dtype).itemsize == 2 else 8


def _vmem_budget():
    """(scoped vmem limit to request, physical vmem bytes)."""
    phys = 128 * 1024 * 1024
    try:
        info = pltpu.get_tpu_info()
        phys = int(getattr(info, "vmem_capacity_bytes", phys))
    except Exception:
        pass
    # v5e/v6e (128 MiB physical) -> 96 MiB scoped; v7x (64 MiB) -> 48 MiB.
    limit = min(phys * 3 // 4, 96 * 1024 * 1024)
    return limit, phys


def _footprint(tm, tn, tk, itemsize):
    # 2x double-buffered x/Wt/out tiles + the f32 accumulator.
    return 2 * (tm * tk + tk * tn + tm * tn) * itemsize + tm * tn * 4


_TM_DEFAULT = 512


def _select_nk_tiles(in_f, out_f, dtype):
    """Pick (tn, tk) from the problem + VMEM budget (batch-independent)."""
    vmem_limit, phys = _vmem_budget()
    # Wider K tile where VMEM allows (v5e/v6e); 512 is enough on v7x and its
    # higher HBM BW already clears the f32 roofline at 512-wide tiles.
    tk0 = 1024 if phys >= 100 * 1024 * 1024 else 512
    tn0 = 512
    tn = min(tn0, _round_up(out_f, _LANE))
    tk = min(tk0, _round_up(in_f, _LANE))

    itemsize = jnp.dtype(dtype).itemsize
    budget = vmem_limit * 6 // 10   # leave headroom for compiler scratch
    while _footprint(_TM_DEFAULT, tn, tk, itemsize) > budget and tk > _LANE:
        tk //= 2
    while _footprint(_TM_DEFAULT, tn, tk, itemsize) > budget and tn > _LANE:
        tn //= 2
    return tn, tk, vmem_limit


# ----------------------------------------------------------------------------
# Kernels
# ----------------------------------------------------------------------------
def _ff_bias_kernel(x_ref, wt_ref, b_ref, o_ref, acc_ref):
    # x_ref: (tm, tk), wt_ref: (tk, tn), b_ref: (1, tn), o_ref: (tm, tn)
    k = pl.program_id(2)

    @pl.when(k == 0)
    def _():
        # Seed the accumulator with the bias (sublane broadcast) so the
        # epilogue needs no extra VPU add.
        acc_ref[...] = jnp.broadcast_to(
            b_ref[...].astype(jnp.float32), acc_ref.shape
        )

    acc_ref[...] += jnp.dot(
        x_ref[...], wt_ref[...], preferred_element_type=jnp.float32
    )

    @pl.when(k == pl.num_programs(2) - 1)
    def _():
        o_ref[...] = acc_ref[...].astype(o_ref.dtype)


def _ff_nobias_kernel(x_ref, wt_ref, o_ref, acc_ref):
    k = pl.program_id(2)

    @pl.when(k == 0)
    def _():
        acc_ref[...] = jnp.zeros_like(acc_ref)

    acc_ref[...] += jnp.dot(
        x_ref[...], wt_ref[...], preferred_element_type=jnp.float32
    )

    @pl.when(k == pl.num_programs(2) - 1)
    def _():
        o_ref[...] = acc_ref[...].astype(o_ref.dtype)


# ----------------------------------------------------------------------------
# pallas_call wrapper on pre-padded operands
# ----------------------------------------------------------------------------
def _pallas_matmul(x_p, wt_p, b_row_p, *, tm, tn, tk, out_dtype, vmem_limit):
    M, K = x_p.shape
    _, N = wt_p.shape
    grid = (M // tm, N // tn, K // tk)

    in_itemsize = jnp.dtype(x_p.dtype).itemsize
    out_itemsize = jnp.dtype(out_dtype).itemsize
    cost = pl.CostEstimate(
        flops=2 * M * K * N,
        transcendentals=0,
        # Re-streaming: x read once per N-block, Wt once per M-block.
        bytes_accessed=(M * K * grid[1] + K * N * grid[0]) * in_itemsize
        + M * N * out_itemsize
        + (N * 4 * grid[0] if b_row_p is not None else 0),
    )
    compiler_params = pltpu.CompilerParams(
        dimension_semantics=("parallel", "parallel", "arbitrary"),
        vmem_limit_bytes=vmem_limit,
    )

    x_spec = pl.BlockSpec((tm, tk), lambda i, j, k: (i, k))
    wt_spec = pl.BlockSpec((tk, tn), lambda i, j, k: (k, j))
    out_spec = pl.BlockSpec((tm, tn), lambda i, j, k: (i, j))  # const over k
    scratch = [pltpu.VMEM((tm, tn), jnp.float32)]
    out_shape = jax.ShapeDtypeStruct((M, N), out_dtype)

    if b_row_p is not None:
        b_spec = pl.BlockSpec((1, tn), lambda i, j, k: (0, j))
        return pl.pallas_call(
            _ff_bias_kernel,
            out_shape=out_shape,
            grid_spec=pltpu.PrefetchScalarGridSpec(
                num_scalar_prefetch=0,
                grid=grid,
                in_specs=[x_spec, wt_spec, b_spec],
                out_specs=out_spec,
                scratch_shapes=scratch,
            ),
            compiler_params=compiler_params,
            cost_estimate=cost,
        )(x_p, wt_p, b_row_p)

    return pl.pallas_call(
        _ff_nobias_kernel,
        out_shape=out_shape,
        grid_spec=pltpu.PrefetchScalarGridSpec(
            num_scalar_prefetch=0,
            grid=grid,
            in_specs=[x_spec, wt_spec],
            out_specs=out_spec,
            scratch_shapes=scratch,
        ),
        compiler_params=compiler_params,
        cost_estimate=cost,
    )(x_p, wt_p)


def _ff_apply(x, wt_p, b_row_p, *, tn, tk, N, K, out_f, vmem_limit,
              compute_dtype):
    """Pad x, pick the batch-dependent M tile, run the kernel, slice back."""
    batch, in_f = x.shape
    sub = _sublane(compute_dtype)

    # M tile: minimize padding waste for awkward batch sizes.
    m_pad = _round_up(batch, sub)
    tm = m_pad if m_pad < 2 * _TM_DEFAULT else _TM_DEFAULT

    itemsize = jnp.dtype(compute_dtype).itemsize
    budget = vmem_limit * 6 // 10
    while _footprint(tm, tn, tk, itemsize) > budget and tm > sub:
        tm = max(sub, _round_up(tm // 2, sub))

    M = _round_up(batch, tm)

    # v7x 2-TensorCore: if the whole problem is one (i, j) block, split a
    # parallel axis in two -- only when it adds no extra padding.
    if M // tm == 1 and N // tn == 1:
        if N >= 2 * _LANE and (N // 2) % _LANE == 0:
            tn = N // 2
        elif M >= 2 * sub and (M // 2) % sub == 0:
            tm = M // 2

    x_c = x.astype(compute_dtype)
    if (M, K) != (batch, in_f):
        x_c = jnp.pad(x_c, ((0, M - batch), (0, K - in_f)))

    out = _pallas_matmul(
        x_c, wt_p, b_row_p,
        tm=tm, tn=tn, tk=tk, out_dtype=x.dtype, vmem_limit=vmem_limit,
    )
    if (M, N) != (batch, out_f):
        out = out[:batch, :out_f]
    return out


# ----------------------------------------------------------------------------
# Public API
# ----------------------------------------------------------------------------
def feedforward_forward(x, W, b=None, *, compute_dtype=jnp.float32):
    """One-shot Feedforward.forward: returns x @ W.T + b.T.

    x: (batch, input_features); W: (output_features, input_features) (PyTorch
    layout); b: (output_features, 1) or None. Note: this path pays the W
    transpose+pad per call -- use FeedforwardPallas for repeated calls.
    """
    batch, in_f = x.shape
    out_f, in_f_w = W.shape
    assert in_f == in_f_w, "W must be (output_features, input_features)"

    tn, tk, vmem_limit = _select_nk_tiles(in_f, out_f, compute_dtype)
    N = _round_up(out_f, tn)
    K = _round_up(in_f, tk)

    Wt = W.T.astype(compute_dtype)                      # (IN, OUT): MXU-native
    if (K, N) != (in_f, out_f):
        Wt = jnp.pad(Wt, ((0, K - in_f), (0, N - out_f)))

    b_row = None
    if b is not None:
        b_row = jnp.reshape(b, (1, out_f)).astype(jnp.float32)
        if N != out_f:
            b_row = jnp.pad(b_row, ((0, 0), (0, N - out_f)))

    return _ff_apply(
        x, Wt, b_row,
        tn=tn, tk=tk, N=N, K=K, out_f=out_f,
        vmem_limit=vmem_limit, compute_dtype=compute_dtype,
    )


def kaiming_he_normal(key, output_size, input_size):
    # Matches kaimingHe_normal: N(0, sqrt(2 / output_size)), shape (out, in).
    std = math.sqrt(2.0 / output_size)
    return std * jax.random.normal(
        key, (output_size, input_size), dtype=jnp.float32
    )


class FeedforwardPallas:
    """Feedforward layer whose forward() uses the Pallas kernel.

    The pre-transposed, pre-padded weight (IN, OUT) and (1, N) bias are cached
    once per parameter set, so repeated forward calls avoid the per-call HBM
    read+write of W for the XLA transpose/pad.
    """

    def __init__(self, input_features, output_features, bias=True, *,
                 key=None, compute_dtype=jnp.float32):
        if key is None:
            key = jax.random.PRNGKey(0)
        self.in_f = input_features
        self.out_f = output_features
        self.bias = bias
        self.compute_dtype = compute_dtype
        self.W = kaiming_he_normal(key, output_features, input_features)
        self.b = (jnp.zeros((output_features, 1), jnp.float32)
                  if bias else None)
        self.refresh_cache()

    def refresh_cache(self):
        """Re-derive cached layouts; call after W / b change (e.g. update)."""
        tn, tk, vmem_limit = _select_nk_tiles(
            self.in_f, self.out_f, self.compute_dtype)
        N = _round_up(self.out_f, tn)
        K = _round_up(self.in_f, tk)

        Wt = self.W.T.astype(self.compute_dtype)
        if (K, N) != (self.in_f, self.out_f):
            Wt = jnp.pad(Wt, ((0, K - self.in_f), (0, N - self.out_f)))
        self._Wt = Wt

        if self.bias:
            b_row = jnp.reshape(self.b, (1, self.out_f)).astype(jnp.float32)
            if N != self.out_f:
                b_row = jnp.pad(b_row, ((0, 0), (0, N - self.out_f)))
            self._b_row = b_row
        else:
            self._b_row = None

        self._tn, self._tk, self._N, self._K = tn, tk, N, K
        self._vmem_limit = vmem_limit

    def forward(self, x):
        self.input = x
        self.output = _ff_apply(
            x, self._Wt, self._b_row,
            tn=self._tn, tk=self._tk, N=self._N, K=self._K,
            out_f=self.out_f, vmem_limit=self._vmem_limit,
            compute_dtype=self.compute_dtype,
        )
        return self.output

    __call__ = forward

    # TODO(synk): backward / update / zero_grad are host-side training
    # bookkeeping in the reference module and are not implemented here.


# ----------------------------------------------------------------------------
# Self-test
# ----------------------------------------------------------------------------
if __name__ == "__main__":
    key = jax.random.PRNGKey(0)
    k_x, k_w, k_x2, k_w2 = jax.random.split(key, 4)

    # Small shapes consistent with the module (batch=2, in=32, out=16),
    # bias path, cached-weight class API.
    batch, input_features, output_features = 2, 32, 16
    x = jax.random.normal(k_x, (batch, input_features), dtype=jnp.float32)
    layer = FeedforwardPallas(input_features, output_features, bias=True,
                              key=k_w)
    out = jax.block_until_ready(layer(x))
    ref = (jnp.dot(x, layer.W.T, precision=jax.lax.Precision.HIGHEST)
           + layer.b.T)
    assert out.shape == (batch, output_features)
    assert jnp.allclose(out, ref, atol=1e-4, rtol=1e-4)

    # Larger, non-tile-multiple shapes exercising padding, the multi-block
    # grid (parallel-axis split), and the no-bias one-shot path.
    b2, i2, o2 = 160, 384, 272
    x2 = jax.random.normal(k_x2, (b2, i2), dtype=jnp.float32)
    W2 = kaiming_he_normal(k_w2, o2, i2)
    out2 = jax.block_until_ready(feedforward_forward(x2, W2, None))
    ref2 = jnp.dot(x2, W2.T, precision=jax.lax.Precision.HIGHEST)
    assert out2.shape == (b2, o2)
    # MXU f32 multi-pass is slightly looser than Precision.HIGHEST.
    assert jnp.allclose(out2, ref2, atol=2e-3, rtol=2e-3)

    print("KERNEL_OK")
</pallas_src>

<mosaic_0001>
module attributes {stable_mosaic.version = 11 : i64} {
  func.func @_ff_bias_kernel(%arg0: i32, %arg1: i32, %arg2: i32, %arg3: memref<8x128xf32, #tpu.memory_space<vmem>>, %arg4: memref<128x128xf32, #tpu.memory_space<vmem>>, %arg5: memref<1x128xf32, #tpu.memory_space<vmem>>, %arg6: memref<8x128xf32, #tpu.memory_space<vmem>>, %arg7: memref<8x128xf32, #tpu.memory_space<vmem>>) attributes {dimension_semantics = [#tpu.dimension_semantics<parallel>, #tpu.dimension_semantics<parallel>, #tpu.dimension_semantics<arbitrary>], iteration_bounds = array<i64: 1, 1, 1>, scalar_prefetch = 0 : i64, scratch_operands = 1 : i64, tpu.core_type = #tpu.core_type<tc>, window_params = [{transform_indices = @transform_0, window_bounds = array<i64: 8, 128>}, {transform_indices = @transform_1, window_bounds = array<i64: 128, 128>}, {transform_indices = @transform_2, window_bounds = array<i64: 1, 128>}, {transform_indices = @transform_3, window_bounds = array<i64: 8, 128>}]} {
    %c0_i32 = arith.constant 0 : i32
    %0 = arith.cmpi eq, %arg2, %c0_i32 : i32
    %1 = arith.extui %0 : i1 to i32
    %c0_i32_0 = arith.constant 0 : i32
    %2 = arith.cmpi ne, %1, %c0_i32_0 : i32
    scf.if %2 {
      %c0_10 = arith.constant 0 : index
      %c0_11 = arith.constant 0 : index
      %12 = vector.load %arg5[%c0_10, %c0_11] : memref<1x128xf32, #tpu.memory_space<vmem>>, vector<1x128xf32>
      %13 = vector.shape_cast %12 : vector<1x128xf32> to vector<1x128xf32>
      %14 = vector.broadcast %13 : vector<1x128xf32> to vector<8x128xf32>
      %c0_12 = arith.constant 0 : index
      %c0_13 = arith.constant 0 : index
      %15 = vector.load %arg7[%c0_12, %c0_13] : memref<8x128xf32, #tpu.memory_space<vmem>>, vector<8x128xf32>
      tpu.vector_store %arg7[%c0_12, %c0_13], %14 {strides = array<i32>} : memref<8x128xf32, #tpu.memory_space<vmem>>, vector<8x128xf32>,
    } else {
    }
    %c0 = arith.constant 0 : index
    %c0_1 = arith.constant 0 : index
    %3 = vector.load %arg7[%c0, %c0_1] : memref<8x128xf32, #tpu.memory_space<vmem>>, vector<8x128xf32>
    %c0_2 = arith.constant 0 : index
    %c0_3 = arith.constant 0 : index
    %4 = vector.load %arg3[%c0_2, %c0_3] : memref<8x128xf32, #tpu.memory_space<vmem>>, vector<8x128xf32>
    %c0_4 = arith.constant 0 : index
    %c0_5 = arith.constant 0 : index
    %5 = vector.load %arg4[%c0_4, %c0_5] : memref<128x128xf32, #tpu.memory_space<vmem>>, vector<128x128xf32>
    %cst = arith.constant dense<0.000000e+00> : vector<8x128xf32>
    %6 = tpu.matmul %4, %5, %cst {dimension_numbers = #tpu.dot_dimension_numbers<[1], [0], [0], [1], [0, 0, 1, 1], [], []>} : vector<8x128xf32>, vector<128x128xf32>, vector<8x128xf32> -> vector<8x128xf32>
    %7 = arith.addf %3, %6 : vector<8x128xf32>
    %c0_6 = arith.constant 0 : index
    %c0_7 = arith.constant 0 : index
    %8 = vector.load %arg7[%c0_6, %c0_7] : memref<8x128xf32, #tpu.memory_space<vmem>>, vector<8x128xf32>
    tpu.vector_store %arg7[%c0_6, %c0_7], %7 {strides = array<i32>} : memref<8x128xf32, #tpu.memory_space<vmem>>, vector<8x128xf32>,
    %c0_i32_8 = arith.constant 0 : i32
    %9 = arith.cmpi eq, %arg2, %c0_i32_8 : i32
    %10 = arith.extui %9 : i1 to i32
    %c0_i32_9 = arith.constant 0 : i32
    %11 = arith.cmpi ne, %10, %c0_i32_9 : i32
    scf.if %11 {
      %c0_10 = arith.constant 0 : index
      %c0_11 = arith.constant 0 : index
      %12 = vector.load %arg7[%c0_10, %c0_11] : memref<8x128xf32, #tpu.memory_space<vmem>>, vector<8x128xf32>
      %c0_12 = arith.constant 0 : index
      %c0_13 = arith.constant 0 : index
      %13 = vector.load %arg6[%c0_12, %c0_13] : memref<8x128xf32, #tpu.memory_space<vmem>>, vector<8x128xf32>
      tpu.vector_store %arg6[%c0_12, %c0_13], %12 {strides = array<i32>} : memref<8x128xf32, #tpu.memory_space<vmem>>, vector<8x128xf32>,
    } else {
    }
    return
  }
  func.func @transform_0(%arg0: i32, %arg1: i32, %arg2: i32) -> (i32, i32) {
    %c0_i32 = arith.constant 0 : i32
    return %arg0, %arg2 : i32, i32
  }
  func.func @transform_1(%arg0: i32, %arg1: i32, %arg2: i32) -> (i32, i32) {
    %c0_i32 = arith.constant 0 : i32
    return %arg2, %arg1 : i32, i32
  }
  func.func @transform_2(%arg0: i32, %arg1: i32, %arg2: i32) -> (i32, i32) {
    %c0_i32 = arith.constant 0 : i32
    %c0_i32_0 = arith.constant 0 : i32
    return %c0_i32, %arg1 : i32, i32
  }
  func.func @transform_3(%arg0: i32, %arg1: i32, %arg2: i32) -> (i32, i32) {
    %c0_i32 = arith.constant 0 : i32
    return %arg0, %arg1 : i32, i32
  }
}

</mosaic_0001>

<llo_original>
// kernel: tpu_custom_call.1
$region0: #{tpu_custom_call.1}
  #allocation0 [shape = 'u32[]', space=smem, size = 0x4, offset = 0x4, fixed_abs, tag = 'smem constant byte address 0x4 - core index']
  #allocation1 [shape = 'u32[144,128]{1,0:T(1,128)}', space=vmem, size = 0x12000, scoped, tag = 'internal scratch']
  #allocation2 [shape = 'f32[8,128]{1,0:T(8,128)}', space=vmem, size = 0x1000, scoped, tag = 'scratch operand']
  %s0 = inlined_call_operand.hbm [shape: f32[8,128], index: 0, kind: input, shape index: {}]
  %s1 = inlined_call_operand.hbm [shape: f32[128,128], index: 1, kind: input, shape index: {}]
  %s2 = inlined_call_operand.hbm [shape: f32[1,128], index: 2, kind: input, shape index: {}]
  %s3 = inlined_call_operand.hbm [shape: f32[8,128], index: 3, kind: output, shape index: {}]
  %s4 = sld [smem:[#allocation0]]
  $region42: #{tpu_custom_call.1} parent=0
    _
  %s6 = ssub.s32 1, %s4
  %s7 = scalar_select 0, %s6, %s4
  $region1: #{tpu_custom_call.1} parent=0
    #allocation3 [shape = 'u8[4096]{0}', space=vmem, size = 0x1000, scoped, tag = 'input window, operand 0, single buffered']
    #allocation4 [shape = 's32[1]{0}', space=sflag, size = 0x4, scoped, tag = 'scoped memory for tpu_custom_call.1']
    #allocation5 [shape = 's32[1]{0}', space=sflag, size = 0x4, scoped, tag = 'scoped memory for tpu_custom_call.1']
    #allocation6 [shape = 'u8[65536]{0}', space=vmem, size = 0x10000, scoped, tag = 'input window, operand 1, single buffered']
    #allocation7 [shape = 's32[1]{0}', space=sflag, size = 0x4, scoped, tag = 'scoped memory for tpu_custom_call.1']
    #allocation8 [shape = 'u8[512]{0}', space=vmem, size = 0x400, scoped, tag = 'input window, operand 2, single buffered']
    #allocation9 [shape = 'u8[4096]{0}', space=vmem, size = 0x1000, scoped, tag = 'output window, operand 0, single buffered']
    %8 = vsyncpa [#allocation4], 0
    %9 = vsyncpa [#allocation7], 0
    %10 = vsyncpa [#allocation5], 0
    // Predicated region
    $region2: #{tpu_custom_call.1} parent=1 // pred_check
      _
    $region3: #{tpu_custom_call.1} parent=1 // pred_check_branch
      %12 = sbr.rel (0) target = $region5
    $region4: #{tpu_custom_call.1} parent=1 // pred_region
      %s14 = ssub.s32 128, 128
      %15 = vsyncadd [#allocation4], %s14
      %s17 = sshll.u32 [#allocation3], 4
      %s18 = int_to_ptr.vmem [resolvable:$true] %s17
      %20 = dma.hbm_to_vmem [thread:$0]  %s0, 128, %s18, [#allocation4]
    $region5: #{tpu_custom_call.1} parent=1 // pred_fallthru
      _
    // Predicated region
    $region6: #{tpu_custom_call.1} parent=1 // pred_check
      _
    $region7: #{tpu_custom_call.1} parent=1 // pred_check_branch
      %22 = sbr.rel (0) target = $region9
    $region8: #{tpu_custom_call.1} parent=1 // pred_region
      %s24 = ssub.s32 2048, 2048
      %25 = vsyncadd [#allocation7], %s24
      %s26 = sshll.u32 [#allocation6], 4
      %s27 = int_to_ptr.vmem [resolvable:$true] %s26
      %32 = dma.hbm_to_vmem [thread:$0]  %s1, 2048, %s27, [#allocation7], 128, 128, 8
    $region9: #{tpu_custom_call.1} parent=1 // pred_fallthru
      _
    // Predicated region
    $region10: #{tpu_custom_call.1} parent=1 // pred_check
      _
    $region11: #{tpu_custom_call.1} parent=1 // pred_check_branch
      %34 = sbr.rel (0) target = $region13
    $region12: #{tpu_custom_call.1} parent=1 // pred_region
      %s36 = ssub.s32 16, 16
      %37 = vsyncadd [#allocation7], %s36
      %s39 = sshll.u32 [#allocation8], 4
      %s40 = int_to_ptr.vmem [resolvable:$true] %s39
      %42 = dma.hbm_to_vmem [thread:$0]  %s2, 16, %s40, [#allocation7]
    $region13: #{tpu_custom_call.1} parent=1 // pred_fallthru
      _
    // Predicated region
    $region14: #{tpu_custom_call.1} parent=1 // pred_check
      _
    $region15: #{tpu_custom_call.1} parent=1 // pred_check_branch
      %44 = sbr.rel (0) target = $region17
    $region16: #{tpu_custom_call.1} parent=1 // pred_region
      %45 = dma.done [#allocation4], 128
    $region17: #{tpu_custom_call.1} parent=1 // pred_fallthru
      _
    // Predicated region
    $region18: #{tpu_custom_call.1} parent=1 // pred_check
      _
    $region19: #{tpu_custom_call.1} parent=1 // pred_check_branch
      %47 = sbr.rel (0) target = $region21
    $region20: #{tpu_custom_call.1} parent=1 // pred_region
      %48 = dma.done [#allocation7], 2048
    $region21: #{tpu_custom_call.1} parent=1 // pred_fallthru
      _
    // Predicated region
    $region22: #{tpu_custom_call.1} parent=1 // pred_check
      _
    $region23: #{tpu_custom_call.1} parent=1 // pred_check_branch
      %50 = sbr.rel (0) target = $region25
    $region24: #{tpu_custom_call.1} parent=1 // pred_region
      %51 = dma.done [#allocation7], 16
    $region25: #{tpu_custom_call.1} parent=1 // pred_fallthru
      _
    %p52 = scmp.eq.s32.totalorder 0, 0
    // Predicated region
    $region26: #{tpu_custom_call.1} parent=1 // pred_check
      %p53 = pneg %p52
    $region27: #{tpu_custom_call.1} parent=1 // pred_check_branch
      %55 = sbr.rel (%p53) target = $region29
    $region28: #{tpu_custom_call.1} parent=1 // pred_region
      %v56 = vld [vmem:[#allocation8] sm:$0x1]
      %v58 = vlaneseq
      %v59 = vshrl.u32 %v58, 7
      %v60 = vsub.s32 0, %v59
      %v61 = vrot.slane %v56, %v60
      %63 = vst [vmem:[#allocation2] sm:$0xff] %v61
    $region29: #{tpu_custom_call.1} parent=1 // pred_fallthru
      _
    %v64 = vld [vmem:[#allocation2] sm:$0xff]
    %v65 = vld [vmem:[#allocation3] sm:$0xff]
    %v66 = vld [vmem:[#allocation6] sm:$0xff]
    %v67 = vld [vmem:[#allocation6 + $0x8] sm:$0xff]
    %v68 = vld [vmem:[#allocation6 + $0x10] sm:$0xff]
    %v69 = vld [vmem:[#allocation6 + $0x18] sm:$0xff]
    %v70 = vld [vmem:[#allocation6 + $0x20] sm:$0xff]
    %v71 = vld [vmem:[#allocation6 + $0x28] sm:$0xff]
    %v72 = vld [vmem:[#allocation6 + $0x30] sm:$0xff]
    %v73 = vld [vmem:[#allocation6 + $0x38] sm:$0xff]
    %v74 = vld [vmem:[#allocation6 + $0x40] sm:$0xff]
    %v75 = vld [vmem:[#allocation6 + $0x48] sm:$0xff]
    %v76 = vld [vmem:[#allocation6 + $0x50] sm:$0xff]
    %v77 = vld [vmem:[#allocation6 + $0x58] sm:$0xff]
    %v78 = vld [vmem:[#allocation6 + $0x60] sm:$0xff]
    %v79 = vld [vmem:[#allocation6 + $0x68] sm:$0xff]
    %v80 = vld [vmem:[#allocation6 + $0x70] sm:$0xff]
    %v81 = vld [vmem:[#allocation6 + $0x78] sm:$0xff]
    %82 = vmatprep.subr.mxu0 0.0
    %83 = vmatpush1.msra.mxu0 %v66
    %84 = vmatprep.subr.mxu0 0.0
    %85 = vmatpush1.msra.mxu0 %v67
    %86 = vmatprep.subr.mxu0 0.0
    %87 = vmatpush1.msra.mxu0 %v68
    %88 = vmatprep.subr.mxu0 0.0
    %89 = vmatpush1.msra.mxu0 %v69
    %90 = vmatprep.subr.mxu0 0.0
    %91 = vmatpush1.msra.mxu0 %v70
    %92 = vmatprep.subr.mxu0 0.0
    %93 = vmatpush1.msra.mxu0 %v71
    %94 = vmatprep.subr.mxu0 0.0
    %95 = vmatpush1.msra.mxu0 %v72
    %96 = vmatprep.subr.mxu0 0.0
    %97 = vmatpush1.msra.mxu0 %v73
    %98 = vmatprep.subr.mxu0 0.0
    %99 = vmatpush1.msra.mxu0 %v74
    %100 = vmatprep.subr.mxu0 0.0
    %101 = vmatpush1.msra.mxu0 %v75
    %102 = vmatprep.subr.mxu0 0.0
    %103 = vmatpush1.msra.mxu0 %v76
    %104 = vmatprep.subr.mxu0 0.0
    %105 = vmatpush1.msra.mxu0 %v77
    %106 = vmatprep.subr.mxu0 0.0
    %107 = vmatpush1.msra.mxu0 %v78
    %108 = vmatprep.subr.mxu0 0.0
    %109 = vmatpush1.msra.mxu0 %v79
    %110 = vmatprep.subr.mxu0 0.0
    %111 = vmatpush1.msra.mxu0 %v80
    %112 = vmatprep.subr.mxu0 0.0
    %113 = vmatpush1.msra.mxu0 %v81
    %114 = vmatprep.subr.mxu0 0.0
    %115 = vmatpush1.msra.mxu0 0.0
    %116 = vmatprep.subr.mxu0 0.0
    %117 = vmatpush1.msra.mxu0 0.0
    %118 = vmatprep.subr.mxu0 0.0
    %119 = vmatpush1.msra.mxu0 0.0
    %120 = vmatprep.subr.mxu0 0.0
    %121 = vmatpush1.msra.mxu0 0.0
    %122 = vmatprep.subr.mxu0 0.0
    %123 = vmatpush1.msra.mxu0 0.0
    %124 = vmatprep.subr.mxu0 0.0
    %125 = vmatpush1.msra.mxu0 0.0
    %126 = vmatprep.subr.mxu0 0.0
    %127 = vmatpush1.msra.mxu0 0.0
    %128 = vmatprep.subr.mxu0 0.0
    %129 = vmatpush1.msra.mxu0 0.0
    %130 = vmatprep.subr.mxu0 0.0
    %131 = vmatpush1.msra.mxu0 0.0
    %132 = vmatprep.subr.mxu0 0.0
    %133 = vmatpush1.msra.mxu0 0.0
    %134 = vmatprep.subr.mxu0 0.0
    %135 = vmatpush1.msra.mxu0 0.0
    %136 = vmatprep.subr.mxu0 0.0
    %137 = vmatpush1.msra.mxu0 0.0
    %138 = vmatprep.subr.mxu0 0.0
    %139 = vmatpush1.msra.mxu0 0.0
    %140 = vmatprep.subr.mxu0 0.0
    %141 = vmatpush1.msra.mxu0 0.0
    %142 = vmatprep.subr.mxu0 0.0
    %143 = vmatpush1.msra.mxu0 0.0
    %144 = vmatprep.subr.mxu0 0.0
    %145 = vmatpush1.msra.mxu0 0.0
    %146 = vmatprep.mubr.f32.mxu0 0.0
    %147 = vmatmul.mubr.f32.gmra.mrb[0].mxu0 %v65
    %v148 = vpop.f32.mrb[0].mxu0
    %v149 = vadd.f32 0.0, %v148
    %v150 = vpop.f32.mrb[0].mxu0
    %151 = vdwg.mxu0
    %v152 = vadd.f32 %v64, %v149
    %153 = vst [vmem:[#allocation2] sm:$0xff] %v152
    // Predicated region
    $region30: #{tpu_custom_call.1} parent=1 // pred_check
      %p154 = pneg %p52
    $region31: #{tpu_custom_call.1} parent=1 // pred_check_branch
      %156 = sbr.rel (%p154) target = $region33
    $region32: #{tpu_custom_call.1} parent=1 // pred_region
      %v157 = vld [vmem:[#allocation2] sm:$0xff]
      %158 = vst [vmem:[#allocation9] sm:$0xff] %v157
    $region33: #{tpu_custom_call.1} parent=1 // pred_fallthru
      _
    // Predicated region
    $region34: #{tpu_custom_call.1} parent=1 // pred_check
      _
    $region35: #{tpu_custom_call.1} parent=1 // pred_check_branch
      %160 = sbr.rel (0) target = $region37
    $region36: #{tpu_custom_call.1} parent=1 // pred_region
      %s162 = ssub.s32 128, 128
      %163 = vsyncadd [#allocation5], %s162
      %s165 = sshll.u32 [#allocation9], 4
      %s166 = int_to_ptr.vmem [resolvable:$true] %s165
      %168 = dma.vmem_to_hbm [thread:$0]  %s166, 128, %s3, [#allocation5]
    $region37: #{tpu_custom_call.1} parent=1 // pred_fallthru
      _
    // Predicated region
    $region38: #{tpu_custom_call.1} parent=1 // pred_check
      _
    $region39: #{tpu_custom_call.1} parent=1 // pred_check_branch
      %170 = sbr.rel (0) target = $region41
    $region40: #{tpu_custom_call.1} parent=1 // pred_region
      %171 = dma.done [#allocation5], 128
    $region41: #{tpu_custom_call.1} parent=1 // pred_fallthru
      _
    %172 = vsyncpa [#allocation4], 1
    %173 = vsyncpa [#allocation7], 1
    %174 = vsyncpa [#allocation5], 1

</llo_original>
